<compile_context>
chip_gen: v5e
topology: v5e:2x2
jax: 0.10.0
libtpu: 0.0.40
codegen_flags: <defaults>
</compile_context>

<pallas_src>
import functools

import jax
import jax.numpy as jnp
from jax.experimental import pallas as pl
from jax.experimental.pallas import tpu as pltpu

_LANE = 128
_SUBLANE = 8
_TARGET_BLOCK_BYTES = 4 * 1024 * 1024   # per input block, per pipeline buffer


def _round_up(x, m):
    return ((x + m - 1) // m) * m


def _device_kind():
    try:
        return jax.devices()[0].device_kind.lower()
    except Exception:
        return ""


def _vmem_capacity_bytes(kind):
    try:
        return int(pltpu.get_tpu_info().vmem_capacity_bytes)
    except Exception:
        pass
    if "v7" in kind:
        return 64 * 1024 * 1024
    if "v5" in kind or "v6" in kind:
        return 128 * 1024 * 1024
    return 64 * 1024 * 1024   # unknown: assume the smallest current per-TC VMEM


def _num_tensorcores(kind):
    # v7x exposes two TensorCores per chip; "parallel" grid axes shard across them.
    return 2 if "v7" in kind else 1


def _choose_tile(total, granule, bytes_per_unit, vmem_bytes, force_even):
    """Tile size (multiple of `granule`) along the streamed axis, plus grid size.

    Sized so that the u, v and out blocks, double-buffered (6 f32 blocks), fit in
    roughly half the per-core VMEM while targeting a few MiB per DMA.
    """
    budget = vmem_bytes // 2                      # headroom for compiler scratch
    max_units = budget // (6 * bytes_per_unit)
    if max_units < granule:
        # TODO(synk): add a group-dim (N*C) tiling path with a per-row sum-of-squares
        # accumulator (grid axis "arbitrary") for very large groups
        # (N*C >~ 175K on v7x / ~350K on v5e-v6e); until then fail loudly.
        raise NotImplementedError(
            f"group too large for one VMEM block: need {6 * granule * bytes_per_unit} B, "
            f"budget {budget} B")
    target_units = max(granule, _TARGET_BLOCK_BYTES // bytes_per_unit)
    tile = min(max_units, target_units, _round_up(total, granule))
    tile = max(granule, (tile // granule) * granule)
    nblk = pl.cdiv(total, tile)
    if force_even and nblk % 2 == 1:
        if nblk == 1:
            if total > granule:                    # split so both TensorCores get work
                tile = max(granule, _round_up(pl.cdiv(total, 2), granule))
        else:
            bigger = _round_up(pl.cdiv(total, nblk - 1), granule)
            if bigger <= max_units:
                tile = bigger                      # fewer, larger blocks -> even count
            else:
                tile = max(granule, _round_up(pl.cdiv(total, nblk + 1), granule))
        nblk = pl.cdiv(total, tile)
    return tile, nblk


# --------------------------------------------------------------------------- kernels
def _lmo_l2_native_kernel(u_ref, v_ref, out_ref, *, alpha, eps):
    """Native layout: u_ref/v_ref = (NC, T_mn), one group per lane column.
    out_ref = (T_mn, NC): the transposed block, so the output array is already in
    the (b, m, n, N, C) flat order the module's reshape expects."""
    u = u_ref[...].astype(jnp.float32)
    v = v_ref[...].astype(jnp.float32)
    sq = jnp.sum(u * u, axis=0, keepdims=True)                 # sublane reduce -> (1, T_mn)
    # alpha / max(||u||, eps) == alpha * rsqrt(max(||u||^2, eps^2)); rsqrt on the EUP.
    scale = alpha * jax.lax.rsqrt(jnp.maximum(sq, eps * eps))
    s = u * scale - v                                          # (NC, T_mn)
    out_ref[...] = s.T.astype(out_ref.dtype)                   # XLU transpose in VMEM


def _lmo_l2_rows_kernel(u_ref, v_ref, out_ref, *, alpha, eps):
    """Row layout fallback: u_ref/v_ref/out_ref = (TR, D), one group per row."""
    u = u_ref[...].astype(jnp.float32)
    v = v_ref[...].astype(jnp.float32)
    sq = jnp.sum(u * u, axis=-1, keepdims=True)                # lane reduce -> (TR, 1)
    scale = alpha * jax.lax.rsqrt(jnp.maximum(sq, eps * eps))
    out_ref[...] = (u * scale - v).astype(out_ref.dtype)


# --------------------------------------------------------------------------- wrappers
def _lmo_l2_native(u3, v3, *, alpha, eps, vmem_bytes, force_even):
    """u3, v3: (B, NC, MN) in the tensors' native memory order.  Returns (B, MN, NC)."""
    B, NC, MN = u3.shape
    t_mn, n_sp = _choose_tile(MN, _LANE, NC * 4, vmem_bytes, force_even)
    kernel = functools.partial(_lmo_l2_native_kernel, alpha=alpha, eps=eps)
    vmem_limit = int(min(vmem_bytes * 3 // 4, 100 * 1024 * 1024))
    return pl.pallas_call(
        kernel,
        out_shape=jax.ShapeDtypeStruct((B, MN, NC), u3.dtype),
        grid=(B, n_sp),
        in_specs=[
            pl.BlockSpec((None, NC, t_mn), lambda bi, si: (bi, 0, si)),
            pl.BlockSpec((None, NC, t_mn), lambda bi, si: (bi, 0, si)),
        ],
        out_specs=pl.BlockSpec((None, t_mn, NC), lambda bi, si: (bi, si, 0)),
        compiler_params=pltpu.CompilerParams(
            dimension_semantics=("parallel", "parallel"),
            vmem_limit_bytes=vmem_limit,
        ),
    )(u3, v3)


def _lmo_l2_rows(u_rows, v_rows, *, alpha, eps, vmem_bytes, force_even):
    """u_rows, v_rows: (R, D) with one group per row.  No padding; ragged edge masked."""
    R, D = u_rows.shape
    tile_r, n_blk = _choose_tile(R, _SUBLANE, D * 4, vmem_bytes, force_even)
    kernel = functools.partial(_lmo_l2_rows_kernel, alpha=alpha, eps=eps)
    vmem_limit = int(min(vmem_bytes * 3 // 4, 100 * 1024 * 1024))
    # TODO(synk): for D < 128 the output stores are lane-masked; packing 128//D groups
    # per vreg row with a segmented norm would make them lane-dense.
    return pl.pallas_call(
        kernel,
        out_shape=jax.ShapeDtypeStruct((R, D), u_rows.dtype),
        grid=(n_blk,),
        in_specs=[
            pl.BlockSpec((tile_r, D), lambda i: (i, 0)),
            pl.BlockSpec((tile_r, D), lambda i: (i, 0)),
        ],
        out_specs=pl.BlockSpec((tile_r, D), lambda i: (i, 0)),
        compiler_params=pltpu.CompilerParams(
            dimension_semantics=("parallel",),
            vmem_limit_bytes=vmem_limit,
        ),
    )(u_rows, v_rows)


def lmo_conv_forward(u, v, *, alpha=1.0, eps=1e-12):
    """JAX/Pallas equivalent of LMOConv.forward(u, v) with an L2-ball group LMO."""
    b, N, C, m, n = u.shape
    NC, MN = N * C, m * n
    kind = _device_kind()
    vmem_bytes = _vmem_capacity_bytes(kind)
    num_tc = _num_tensorcores(kind)

    # Native-layout path: lane axis = m*n stays dense (>=128) and N*C is a multiple of
    # 128 so the in-kernel (NC, T_mn) -> (T_mn, NC) transpose is tile-aligned.
    # TODO(synk): relax the N*C % 128 gate to N*C % 8 once padded in-VMEM transposes
    # are verified on all target generations.
    native_ok = (
        MN >= _LANE
        and NC % _LANE == 0
        and 6 * _LANE * NC * 4 <= vmem_bytes // 2     # a minimal 128-lane block fits
    )

    if native_ok:
        u3 = u.reshape(b, NC, MN)                      # free row-major relabels
        v3 = v.reshape(b, NC, MN)
        force_even = num_tc > 1 and (b % num_tc != 0)
        dir_flat = _lmo_l2_native(u3, v3, alpha=alpha, eps=eps,
                                  vmem_bytes=vmem_bytes, force_even=force_even)
        # dir_flat is (b, m*n, N*C): flat order (b, m, n, N, C); reshape is a relabel,
        # faithful to the PyTorch module's `.reshape(b, N, C, m, n)` (NOT an inverse permute).
        update_dir = dir_flat.reshape(b, N, C, m, n)
    else:
        # Small-spatial fallback: one group per row after a host-side permute.
        u_rows = jnp.transpose(u, (0, 3, 4, 1, 2)).reshape(b * MN, NC)
        v_rows = jnp.transpose(v, (0, 3, 4, 1, 2)).reshape(b * MN, NC)
        dir_rows = _lmo_l2_rows(u_rows, v_rows, alpha=alpha, eps=eps,
                                vmem_bytes=vmem_bytes, force_even=(num_tc > 1))
        update_dir = dir_rows.reshape(b, N, C, m, n)

    max_step_size = jnp.float32(1.0)   # L2-ball LMO always admits a full step
    return update_dir, max_step_size


def _reference_forward(u, v, *, alpha=1.0, eps=1e-12):
    """Pure-JAX reference for correctness checking."""
    b, N, C, m, n = u.shape
    u_p = jnp.transpose(u, (0, 3, 4, 1, 2)).reshape(b * m * n, N * C)
    v_p = jnp.transpose(v, (0, 3, 4, 1, 2)).reshape(b * m * n, N * C)
    norm = jnp.sqrt(jnp.sum(u_p * u_p, axis=-1, keepdims=True))
    s = alpha * u_p / jnp.maximum(norm, eps)
    d = (s - v_p).reshape(b, m, n, N, C).reshape(b, N, C, m, n)
    return d, jnp.float32(1.0)


if __name__ == "__main__":
    key = jax.random.PRNGKey(0)
    k1, k2, k3, k4 = jax.random.split(key, 4)
    fwd = jax.jit(lmo_conv_forward)

    # Case 1: native-layout path (no host transposes): m*n >= 128, N*C % 128 == 0.
    b, N, C, m, n = 2, 4, 32, 16, 16
    u = jax.random.normal(k1, (b, N, C, m, n), dtype=jnp.float32)
    v = jax.random.normal(k2, (b, N, C, m, n), dtype=jnp.float32)
    update_dir, max_step = fwd(u, v)
    update_dir = jax.block_until_ready(update_dir)
    max_step = jax.block_until_ready(max_step)
    ref_dir, ref_step = _reference_forward(u, v)
    assert update_dir.shape == (b, N, C, m, n)
    assert jnp.allclose(update_dir, ref_dir, atol=1e-4, rtol=1e-4), "native path mismatch"
    assert jnp.allclose(max_step, ref_step)

    # Case 2: small-spatial fallback path (row layout, ragged edge masked by Pallas).
    b2, N2, C2, m2, n2 = 2, 4, 8, 4, 4
    u2 = jax.random.normal(k3, (b2, N2, C2, m2, n2), dtype=jnp.float32)
    v2 = jax.random.normal(k4, (b2, N2, C2, m2, n2), dtype=jnp.float32)
    d2, step2 = fwd(u2, v2)
    d2 = jax.block_until_ready(d2)
    d2_ref, _ = _reference_forward(u2, v2)
    assert d2.shape == (b2, N2, C2, m2, n2)
    assert jnp.allclose(d2, d2_ref, atol=1e-4, rtol=1e-4), "fallback path mismatch"

    print("KERNEL_OK")
</pallas_src>

<mosaic_0001>
module attributes {stable_mosaic.version = 11 : i64} {
  func.func @_lmo_l2_native_kernel(%arg0: i32, %arg1: i32, %arg2: memref<1x128x256xf32, #tpu.memory_space<vmem>>, %arg3: memref<1x128x256xf32, #tpu.memory_space<vmem>>, %arg4: memref<1x256x128xf32, #tpu.memory_space<vmem>>) attributes {dimension_semantics = [#tpu.dimension_semantics<parallel>, #tpu.dimension_semantics<parallel>], iteration_bounds = array<i64: 2, 1>, scalar_prefetch = 0 : i64, scratch_operands = 0 : i64, tpu.core_type = #tpu.core_type<tc>, window_params = [{transform_indices = @transform_0, window_bounds = array<i64: 1, 128, 256>}, {transform_indices = @transform_1, window_bounds = array<i64: 1, 128, 256>}, {transform_indices = @transform_2, window_bounds = array<i64: 1, 256, 128>}]} {
    %c0 = arith.constant 0 : index
    %c0_0 = arith.constant 0 : index
    %c0_1 = arith.constant 0 : index
    %0 = vector.load %arg2[%c0, %c0_0, %c0_1] : memref<1x128x256xf32, #tpu.memory_space<vmem>>, vector<1x128x256xf32>
    %1 = vector.shape_cast %0 : vector<1x128x256xf32> to vector<128x256xf32>
    %c0_2 = arith.constant 0 : index
    %c0_3 = arith.constant 0 : index
    %c0_4 = arith.constant 0 : index
    %2 = vector.load %arg3[%c0_2, %c0_3, %c0_4] : memref<1x128x256xf32, #tpu.memory_space<vmem>>, vector<1x128x256xf32>
    %3 = vector.shape_cast %2 : vector<1x128x256xf32> to vector<128x256xf32>
    %4 = arith.mulf %1, %1 : vector<128x256xf32>
    %cst = arith.constant dense<0.000000e+00> : vector<256xf32>
    %5 = vector.multi_reduction <add>, %4, %cst [0] : vector<128x256xf32> to vector<256xf32>
    %6 = vector.shape_cast %5 : vector<256xf32> to vector<1x256xf32>
    %cst_5 = arith.constant 1.000000e-24 : f32
    %7 = vector.broadcast %cst_5 : f32 to vector<1x256xf32>
    %8 = arith.maximumf %6, %7 : vector<1x256xf32>
    %9 = math.rsqrt %8 : vector<1x256xf32>
    %cst_6 = arith.constant 1.000000e+00 : f32
    %10 = vector.broadcast %cst_6 : f32 to vector<1x256xf32>
    %11 = arith.mulf %10, %9 : vector<1x256xf32>
    %12 = vector.broadcast %11 : vector<1x256xf32> to vector<128x256xf32>
    %13 = arith.mulf %1, %12 : vector<128x256xf32>
    %14 = arith.subf %13, %3 : vector<128x256xf32>
    %15 = tpu.transpose %14, [1, 0] : vector<128x256xf32> -> vector<256x128xf32>
    %c0_7 = arith.constant 0 : index
    %c0_8 = arith.constant 0 : index
    %c0_9 = arith.constant 0 : index
    %16 = vector.load %arg4[%c0_7, %c0_8, %c0_9] : memref<1x256x128xf32, #tpu.memory_space<vmem>>, vector<1x256x128xf32>
    %17 = vector.shape_cast %16 : vector<1x256x128xf32> to vector<256x128xf32>
    %18 = vector.shape_cast %15 : vector<256x128xf32> to vector<1x256x128xf32>
    tpu.vector_store %arg4[%c0_7, %c0_8, %c0_9], %18 {strides = array<i32>} : memref<1x256x128xf32, #tpu.memory_space<vmem>>, vector<1x256x128xf32>,
    return
  }
  func.func @transform_0(%arg0: i32, %arg1: i32) -> (i32, i32, i32) {
    %c0_i32 = arith.constant 0 : i32
    %c0_i32_0 = arith.constant 0 : i32
    return %arg0, %c0_i32, %arg1 : i32, i32, i32
  }
  func.func @transform_1(%arg0: i32, %arg1: i32) -> (i32, i32, i32) {
    %c0_i32 = arith.constant 0 : i32
    %c0_i32_0 = arith.constant 0 : i32
    return %arg0, %c0_i32, %arg1 : i32, i32, i32
  }
  func.func @transform_2(%arg0: i32, %arg1: i32) -> (i32, i32, i32) {
    %c0_i32 = arith.constant 0 : i32
    %c0_i32_0 = arith.constant 0 : i32
    return %arg0, %arg1, %c0_i32 : i32, i32, i32
  }
}

</mosaic_0001>

<llo_original>
// kernel: lmo_conv_forward.1
$region0: #{lmo_conv_forward.1}
  #allocation0 [shape = 'u32[]', space=smem, size = 0x4, offset = 0x4, fixed_abs, tag = 'smem constant byte address 0x4 - core index']
  #allocation1 [shape = 'u32[72,128]{1,0:T(1,128)}', space=vmem, size = 0x9000, scoped, tag = 'internal scratch']
  %s0 = inlined_call_operand.vmem [shape: f32[2,128,256], index: 0, kind: input, shape index: {}]
  %s1 = inlined_call_operand.vmem [shape: f32[2,128,256], index: 1, kind: input, shape index: {}]
  %s2 = inlined_call_operand.vmem [shape: f32[2,256,128], index: 2, kind: output, shape index: {}]
  %s3 = sld [smem:[#allocation0]]
  $region41: #{lmo_conv_forward.1} parent=0
    _
  %s5 = ssub.s32 1, %s3
  %s6 = scalar_select 0, %s5, %s3
  loop: start=0, step=1, limit=4
  $region2: #{lmo_conv_forward.1} parent=0 // loop_pre_header
    _
  $region3: #{lmo_conv_forward.1} parent=0 // loop_header
    %s8 = sphi 0, %s12
    %p9 = scmp.ge.s32.totalorder %s8, 4
    %s15 = sphi 0, %s27
    %s16 = sphi 0, %s23
    %s17 = sphi 0, %s15
    %s18 = sphi 0, %s16
    %s19 = sphi 0, %s17
    %s20 = sphi 0, %s18
    %s32 = sphi 0, %s34
    %s35 = sphi 0, %s32
    %s36 = sphi 0, %s35
    %s52 = sphi 0, %s36
    %s60 = sphi 0, %s62
    %s63 = sphi 0, %s60
    %s64 = sphi 0, %s63
    %s80 = sphi 0, %s64
    %s88 = sphi 0, %s90
    %s91 = sphi 0, %s88
    %s92 = sphi 0, %s91
    %s108 = sphi 0, %s92
  $region4: #{lmo_conv_forward.1} parent=0 // loop_header_branch
    %11 = sbr.rel (%p9) target = $region8
  $region5: #{lmo_conv_forward.1} parent=0 // loop_body
    %s13 = ssub.s32 %s8, 1
    %s14 = ssub.s32 %s8, 2
    %s21 = sadd.s32 1, %s16
    %p22 = scmp.ge.s32.totalorder %s21, 1
    %s23 = scalar_select %p22, 0, %s21
    %s24 = sadd.s32 1, %s15
    %s25 = scalar_select %p22, %s24, %s15
    %p26 = scmp.ge.s32.totalorder %s25, 2
    %s27 = scalar_select %p26, 0, %s25
    %s28 = ssub.s32 %s15, %s27
    %s29 = ssub.s32 %s16, %s23
    %s30 = sor.u32 %s28, %s29
    %p31 = scmp.eq.s32.totalorder %s30, 0
    %s33 = sadd.s32 %s32, 1
    %s34 = scalar_select %p31, %s32, %s33
    %p37 = pneg %p31
    %p38 = scmp.eq.s32.totalorder %s8, 1
    %p39 = por %p37, %p38
    %p40 = scmp.ne.s32.totalorder %s32, %s35
    %p41 = scmp.eq.s32.totalorder %s8, 0
    %p42 = por %p40, %p41
    %p43 = scmp.ne.s32.totalorder %s32, %s35
    %p44 = scmp.eq.s32.totalorder %s13, 1
    %p45 = por %p43, %p44
    %p46 = scmp.ne.s32.totalorder %s35, %s36
    %p47 = scmp.eq.s32.totalorder %s13, 0
    %p48 = por %p46, %p47
    %p49 = scmp.ne.s32.totalorder %s35, %s36
    %p50 = scmp.eq.s32.totalorder %s14, 1
    %p51 = por %p49, %p50
    %p53 = scmp.ne.s32.totalorder %s36, %s52
    %p54 = scmp.eq.s32.totalorder %s14, 0
    %p55 = por %p53, %p54
    %s56 = ssub.s32 %s15, %s27
    %s57 = ssub.s32 %s16, %s23
    %s58 = sor.u32 %s56, %s57
    %p59 = scmp.eq.s32.totalorder %s58, 0
    %s61 = sadd.s32 %s60, 1
    %s62 = scalar_select %p59, %s60, %s61
    %p65 = pneg %p59
    %p66 = scmp.eq.s32.totalorder %s8, 1
    %p67 = por %p65, %p66
    %p68 = scmp.ne.s32.totalorder %s60, %s63
    %p69 = scmp.eq.s32.totalorder %s8, 0
    %p70 = por %p68, %p69
    %p71 = scmp.ne.s32.totalorder %s60, %s63
    %p72 = scmp.eq.s32.totalorder %s13, 1
    %p73 = por %p71, %p72
    %p74 = scmp.ne.s32.totalorder %s63, %s64
    %p75 = scmp.eq.s32.totalorder %s13, 0
    %p76 = por %p74, %p75
    %p77 = scmp.ne.s32.totalorder %s63, %s64
    %p78 = scmp.eq.s32.totalorder %s14, 1
    %p79 = por %p77, %p78
    %p81 = scmp.ne.s32.totalorder %s64, %s80
    %p82 = scmp.eq.s32.totalorder %s14, 0
    %p83 = por %p81, %p82
    %s84 = ssub.s32 %s15, %s27
    %s85 = ssub.s32 %s16, %s23
    %s86 = sor.u32 %s84, %s85
    %p87 = scmp.eq.s32.totalorder %s86, 0
    %s89 = sadd.s32 %s88, 1
    %s90 = scalar_select %p87, %s88, %s89
    %p93 = pneg %p87
    %p94 = scmp.eq.s32.totalorder %s8, 1
    %p95 = por %p93, %p94
    %p96 = scmp.ne.s32.totalorder %s88, %s91
    %p97 = scmp.eq.s32.totalorder %s8, 0
    %p98 = por %p96, %p97
    %p99 = scmp.ne.s32.totalorder %s88, %s91
    %p100 = scmp.eq.s32.totalorder %s13, 1
    %p101 = por %p99, %p100
    %p102 = scmp.ne.s32.totalorder %s91, %s92
    %p103 = scmp.eq.s32.totalorder %s13, 0
    %p104 = por %p102, %p103
    %p105 = scmp.ne.s32.totalorder %s91, %s92
    %p106 = scmp.eq.s32.totalorder %s14, 1
    %p107 = por %p105, %p106
    %p109 = scmp.ne.s32.totalorder %s92, %s108
    %p110 = scmp.eq.s32.totalorder %s14, 0
    %p111 = por %p109, %p110
    %p112 = scmp.le.s32.totalorder 1, %s8
    %p113 = scmp.lt.s32.totalorder %s8, 3
    %p114 = pnand %p112, %p113
    %p115 = pneg %p114
    // Predicated region
    $region9: #{lmo_conv_forward.1} parent=5 // pred_check
      _
    $region10: #{lmo_conv_forward.1} parent=5 // pred_check_branch
      %117 = sbr.rel (%p114) target = $region12
    $region11: #{lmo_conv_forward.1} parent=5 // pred_region
      %s118 = ssub.s32 %s8, 1
    $region12: #{lmo_conv_forward.1} parent=5 // pred_fallthru
      _
    %p119 = scmp.lt.s32.totalorder %s8, 2
    // Predicated region
    $region13: #{lmo_conv_forward.1} parent=5 // pred_check
      %p120 = pneg %p119
    $region14: #{lmo_conv_forward.1} parent=5 // pred_check_branch
      %122 = sbr.rel (%p120) target = $region16
    $region15: #{lmo_conv_forward.1} parent=5 // pred_region
      // Predicated region
      $region17: #{lmo_conv_forward.1} parent=15 // pred_check
        %p123 = pneg %p42
      $region18: #{lmo_conv_forward.1} parent=15 // pred_check_branch
        %125 = sbr.rel (%p123) target = $region20
      $region19: #{lmo_conv_forward.1} parent=15 // pred_region
        %s126 = smul.u32 2, %s16
        %p127 = scmp.lt.s32.totalorder %s15, 1
        %s128 = scalar_select %p127, %s15, 1
        %p129 = scmp.lt.s32.totalorder %s126, 1
        %s130 = scalar_select %p129, %s126, 1
        %s131 = smul.addr %s128, 32
        %s132 = sadd.s32 %s130, %s131
        %s133 = smul.addr %s132, 8
        %s134 = scalar_lea.vmem %s0, %s133
        %s135 = smul.u32 2, %s16
      $region20: #{lmo_conv_forward.1} parent=15 // pred_fallthru
        _
      // Predicated region
      $region21: #{lmo_conv_forward.1} parent=15 // pred_check
        %p136 = pneg %p70
      $region22: #{lmo_conv_forward.1} parent=15 // pred_check_branch
        %138 = sbr.rel (%p136) target = $region24
      $region23: #{lmo_conv_forward.1} parent=15 // pred_region
        %s139 = smul.u32 2, %s16
        %p140 = scmp.lt.s32.totalorder %s15, 1
        %s141 = scalar_select %p140, %s15, 1
        %p142 = scmp.lt.s32.totalorder %s139, 1
        %s143 = scalar_select %p142, %s139, 1
        %s144 = smul.addr %s141, 32
        %s145 = sadd.s32 %s143, %s144
        %s146 = smul.addr %s145, 8
        %s147 = scalar_lea.vmem %s1, %s146
        %s148 = smul.u32 2, %s16
      $region24: #{lmo_conv_forward.1} parent=15 // pred_fallthru
        _
    $region16: #{lmo_conv_forward.1} parent=5 // pred_fallthru
      _
    %p149 = scmp.le.s32.totalorder 1, %s8
    %p150 = scmp.lt.s32.totalorder %s8, 3
    %p151 = pnand %p149, %p150
    %p152 = pneg %p151
    // Predicated region
    $region25: #{lmo_conv_forward.1} parent=5 // pred_check
      _
    $region26: #{lmo_conv_forward.1} parent=5 // pred_check_branch
      %154 = sbr.rel (%p151) target = $region28
    $region27: #{lmo_conv_forward.1} parent=5 // pred_region
      %s155 = ssub.s32 %s8, 1
      %s156 = smul.u32 2, %s18
      %p157 = scmp.lt.s32.totalorder %s17, 1
      %s158 = scalar_select %p157, %s17, 1
      %p159 = scmp.lt.s32.totalorder %s156, 1
      %s160 = scalar_select %p159, %s156, 1
      %s161 = smul.addr %s158, 32
      %s162 = sadd.s32 %s160, %s161
      %s163 = smul.addr %s162, 8
      %s164 = scalar_lea.vmem %s0, %s163
      %p165 = pneg %p48
      %p166 = pneg %p45
      %s167 = smul.u32 2, %s18
      %p168 = scmp.lt.s32.totalorder %s17, 1
      %s169 = scalar_select %p168, %s17, 1
      %p170 = scmp.lt.s32.totalorder %s167, 1
      %s171 = scalar_select %p170, %s167, 1
      %s172 = smul.addr %s169, 32
      %s173 = sadd.s32 %s171, %s172
      %s174 = smul.addr %s173, 8
      %s175 = scalar_lea.vmem %s1, %s174
      %p176 = pneg %p76
      %p177 = pneg %p73
      %p178 = pneg %p104
      %p179 = pneg %p101
      %s180 = smul.u32 32, %s18
      %p181 = scmp.lt.s32.totalorder %s17, 1
      %s182 = scalar_select %p181, %s17, 1
      %p183 = scmp.lt.s32.totalorder %s180, 31
      %s184 = scalar_select %p183, %s180, 31
      %s185 = smul.addr %s182, 32
      %s186 = sadd.s32 %s184, %s185
      %s187 = smul.addr %s186, 8
      %s188 = scalar_lea.vmem %s2, %s187
      %s189 = smul.u32 2, %s18
      %p190 = scmp.lt.s32.totalorder %s17, 1
      %s191 = scalar_select %p190, %s17, 1
      %p192 = scmp.lt.s32.totalorder %s189, 1
      %s193 = scalar_select %p192, %s189, 1
      %s194 = smul.addr %s191, 32
      %s195 = sadd.s32 %s193, %s194
      %s196 = smul.addr %s195, 8
      %s197 = scalar_lea.vmem %s0, %s196
      %s198 = smul.u32 2, %s18
      %s199 = smul.u32 2, %s18
      %p200 = scmp.lt.s32.totalorder %s17, 1
      %s201 = scalar_select %p200, %s17, 1
      %p202 = scmp.lt.s32.totalorder %s199, 1
      %s203 = scalar_select %p202, %s199, 1
      %s204 = smul.addr %s201, 32
      %s205 = sadd.s32 %s203, %s204
      %s206 = smul.addr %s205, 8
      %s207 = scalar_lea.vmem %s1, %s206
      %s208 = smul.u32 2, %s18
      %s209 = smul.u32 32, %s18
      %p210 = scmp.lt.s32.totalorder %s17, 1
      %s211 = scalar_select %p210, %s17, 1
      %p212 = scmp.lt.s32.totalorder %s209, 31
      %s213 = scalar_select %p212, %s209, 31
      %s214 = smul.addr %s211, 32
      %s215 = sadd.s32 %s213, %s214
      %s216 = smul.addr %s215, 8
      %s217 = scalar_lea.vmem %s2, %s216
      %s218 = smul.u32 32, %s18
      %v219 = vld [vmem:[%s197] sm:$0xff]
      %v220 = vld [vmem:[%s197 + $0x8] sm:$0xff]
      %v221 = vld [vmem:[%s197 + $0x10] sm:$0xff]
      %v222 = vld [vmem:[%s197 + $0x18] sm:$0xff]
      %v223 = vld [vmem:[%s197 + $0x20] sm:$0xff]
      %v224 = vld [vmem:[%s197 + $0x28] sm:$0xff]
      %v225 = vld [vmem:[%s197 + $0x30] sm:$0xff]
      %v226 = vld [vmem:[%s197 + $0x38] sm:$0xff]
      %v227 = vld [vmem:[%s197 + $0x40] sm:$0xff]
      %v228 = vld [vmem:[%s197 + $0x48] sm:$0xff]
      %v229 = vld [vmem:[%s197 + $0x50] sm:$0xff]
      %v230 = vld [vmem:[%s197 + $0x58] sm:$0xff]
      %v231 = vld [vmem:[%s197 + $0x60] sm:$0xff]
      %v232 = vld [vmem:[%s197 + $0x68] sm:$0xff]
      %v233 = vld [vmem:[%s197 + $0x70] sm:$0xff]
      %v234 = vld [vmem:[%s197 + $0x78] sm:$0xff]
      %v235 = vld [vmem:[%s197 + $0x80] sm:$0xff]
      %v236 = vld [vmem:[%s197 + $0x88] sm:$0xff]
      %v237 = vld [vmem:[%s197 + $0x90] sm:$0xff]
      %v238 = vld [vmem:[%s197 + $0x98] sm:$0xff]
      %v239 = vld [vmem:[%s197 + $0xa0] sm:$0xff]
      %v240 = vld [vmem:[%s197 + $0xa8] sm:$0xff]
      %v241 = vld [vmem:[%s197 + $0xb0] sm:$0xff]
      %v242 = vld [vmem:[%s197 + $0xb8] sm:$0xff]
      %v243 = vld [vmem:[%s197 + $0xc0] sm:$0xff]
      %v244 = vld [vmem:[%s197 + $0xc8] sm:$0xff]
      %v245 = vld [vmem:[%s197 + $0xd0] sm:$0xff]
      %v246 = vld [vmem:[%s197 + $0xd8] sm:$0xff]
      %v247 = vld [vmem:[%s197 + $0xe0] sm:$0xff]
      %v248 = vld [vmem:[%s197 + $0xe8] sm:$0xff]
      %v249 = vld [vmem:[%s197 + $0xf0] sm:$0xff]
      %v250 = vld [vmem:[%s197 + $0xf8] sm:$0xff]
      %v251 = vld [vmem:[%s207] sm:$0xff]
      %v252 = vld [vmem:[%s207 + $0x8] sm:$0xff]
      %v253 = vld [vmem:[%s207 + $0x10] sm:$0xff]
      %v254 = vld [vmem:[%s207 + $0x18] sm:$0xff]
      %v255 = vld [vmem:[%s207 + $0x20] sm:$0xff]
      %v256 = vld [vmem:[%s207 + $0x28] sm:$0xff]
      %v257 = vld [vmem:[%s207 + $0x30] sm:$0xff]
      %v258 = vld [vmem:[%s207 + $0x38] sm:$0xff]
      %v259 = vld [vmem:[%s207 + $0x40] sm:$0xff]
      %v260 = vld [vmem:[%s207 + $0x48] sm:$0xff]
      %v261 = vld [vmem:[%s207 + $0x50] sm:$0xff]
      %v262 = vld [vmem:[%s207 + $0x58] sm:$0xff]
      %v263 = vld [vmem:[%s207 + $0x60] sm:$0xff]
      %v264 = vld [vmem:[%s207 + $0x68] sm:$0xff]
      %v265 = vld [vmem:[%s207 + $0x70] sm:$0xff]
      %v266 = vld [vmem:[%s207 + $0x78] sm:$0xff]
      %v267 = vld [vmem:[%s207 + $0x80] sm:$0xff]
      %v268 = vld [vmem:[%s207 + $0x88] sm:$0xff]
      %v269 = vld [vmem:[%s207 + $0x90] sm:$0xff]
      %v270 = vld [vmem:[%s207 + $0x98] sm:$0xff]
      %v271 = vld [vmem:[%s207 + $0xa0] sm:$0xff]
      %v272 = vld [vmem:[%s207 + $0xa8] sm:$0xff]
      %v273 = vld [vmem:[%s207 + $0xb0] sm:$0xff]
      %v274 = vld [vmem:[%s207 + $0xb8] sm:$0xff]
      %v275 = vld [vmem:[%s207 + $0xc0] sm:$0xff]
      %v276 = vld [vmem:[%s207 + $0xc8] sm:$0xff]
      %v277 = vld [vmem:[%s207 + $0xd0] sm:$0xff]
      %v278 = vld [vmem:[%s207 + $0xd8] sm:$0xff]
      %v279 = vld [vmem:[%s207 + $0xe0] sm:$0xff]
      %v280 = vld [vmem:[%s207 + $0xe8] sm:$0xff]
      %v281 = vld [vmem:[%s207 + $0xf0] sm:$0xff]
      %v282 = vld [vmem:[%s207 + $0xf8] sm:$0xff]
      %v283 = vmul.f32 %v219, %v219
      %v284 = vmul.f32 %v220, %v220
      %v285 = vmul.f32 %v221, %v221
      %v286 = vmul.f32 %v222, %v222
      %v287 = vmul.f32 %v223, %v223
      %v288 = vmul.f32 %v224, %v224
      %v289 = vmul.f32 %v225, %v225
      %v290 = vmul.f32 %v226, %v226
      %v291 = vmul.f32 %v227, %v227
      %v292 = vmul.f32 %v228, %v228
      %v293 = vmul.f32 %v229, %v229
      %v294 = vmul.f32 %v230, %v230
      %v295 = vmul.f32 %v231, %v231
      %v296 = vmul.f32 %v232, %v232
      %v297 = vmul.f32 %v233, %v233
      %v298 = vmul.f32 %v234, %v234
      %v299 = vmul.f32 %v235, %v235
      %v300 = vmul.f32 %v236, %v236
      %v301 = vmul.f32 %v237, %v237
      %v302 = vmul.f32 %v238, %v238
      %v303 = vmul.f32 %v239, %v239
      %v304 = vmul.f32 %v240, %v240
      %v305 = vmul.f32 %v241, %v241
      %v306 = vmul.f32 %v242, %v242
      %v307 = vmul.f32 %v243, %v243
      %v308 = vmul.f32 %v244, %v244
      %v309 = vmul.f32 %v245, %v245
      %v310 = vmul.f32 %v246, %v246
      %v311 = vmul.f32 %v247, %v247
      %v312 = vmul.f32 %v248, %v248
      %v313 = vmul.f32 %v249, %v249
      %v314 = vmul.f32 %v250, %v250
      %v315 = vadd.f32 %v283, %v285
      %v316 = vadd.f32 %v315, %v287
      %v317 = vadd.f32 %v316, %v289
      %v318 = vadd.f32 %v317, %v291
      %v319 = vadd.f32 %v318, %v293
      %v320 = vadd.f32 %v319, %v295
      %v321 = vadd.f32 %v320, %v297
      %v322 = vadd.f32 %v321, %v299
      %v323 = vadd.f32 %v322, %v301
      %v324 = vadd.f32 %v323, %v303
      %v325 = vadd.f32 %v324, %v305
      %v326 = vadd.f32 %v325, %v307
      %v327 = vadd.f32 %v326, %v309
      %v328 = vadd.f32 %v327, %v311
      %v329 = vadd.f32 %v328, %v313
      %v330 = vrot.slane %v329, 4
      %v331 = vadd.f32 %v329, %v330
      %v332 = vrot.slane %v331, 2
      %v333 = vadd.f32 %v331, %v332
      %v334 = vrot.slane %v333, 1
      %v335 = vadd.f32 %v333, %v334
      %v336 = vadd.f32 %v284, %v286
      %v337 = vadd.f32 %v336, %v288
      %v338 = vadd.f32 %v337, %v290
      %v339 = vadd.f32 %v338, %v292
      %v340 = vadd.f32 %v339, %v294
      %v341 = vadd.f32 %v340, %v296
      %v342 = vadd.f32 %v341, %v298
      %v343 = vadd.f32 %v342, %v300
      %v344 = vadd.f32 %v343, %v302
      %v345 = vadd.f32 %v344, %v304
      %v346 = vadd.f32 %v345, %v306
      %v347 = vadd.f32 %v346, %v308
      %v348 = vadd.f32 %v347, %v310
      %v349 = vadd.f32 %v348, %v312
      %v350 = vadd.f32 %v349, %v314
      %v351 = vrot.slane %v350, 4
      %v352 = vadd.f32 %v350, %v351
      %v353 = vrot.slane %v352, 2
      %v354 = vadd.f32 %v352, %v353
      %v355 = vrot.slane %v354, 1
      %v356 = vadd.f32 %v354, %v355
      %v357 = vmax.f32 %v335, 1e-24
      %v358 = vmax.f32 %v356, 1e-24
      %v359 = vrsqrt.pop %v357
      %v360 = vmul.f32 %v359, %v357
      %v361 = vmul.f32 %v360, %v359
      %v362 = vmul.f32 0.5, %v361
      %v363 = vsub.f32 1.5, %v362
      %v364 = vmul.f32 %v359, %v363
      %vm365 = vweird.f32 %v357
      %vm366 = vweird.f32 %v359
      %vm367 = vmor %vm365, %vm366
      %v368 = vsel %vm367, %v359, %v364
      %v369 = vrsqrt.pop %v358
      %v370 = vmul.f32 %v369, %v358
      %v371 = vmul.f32 %v370, %v369
      %v372 = vmul.f32 0.5, %v371
      %v373 = vsub.f32 1.5, %v372
      %v374 = vmul.f32 %v369, %v373
      %vm375 = vweird.f32 %v358
      %vm376 = vweird.f32 %v369
      %vm377 = vmor %vm375, %vm376
      %v378 = vsel %vm377, %v369, %v374
      %v379 = vmul.f32 %v219, %v368
      %v380 = vmul.f32 %v220, %v378
      %v381 = vmul.f32 %v221, %v368
      %v382 = vmul.f32 %v222, %v378
      %v383 = vmul.f32 %v223, %v368
      %v384 = vmul.f32 %v224, %v378
      %v385 = vmul.f32 %v225, %v368
      %v386 = vmul.f32 %v226, %v378
      %v387 = vmul.f32 %v227, %v368
      %v388 = vmul.f32 %v228, %v378
      %v389 = vmul.f32 %v229, %v368
      %v390 = vmul.f32 %v230, %v378
      %v391 = vmul.f32 %v231, %v368
      %v392 = vmul.f32 %v232, %v378
      %v393 = vmul.f32 %v233, %v368
      %v394 = vmul.f32 %v234, %v378
      %v395 = vmul.f32 %v235, %v368
      %v396 = vmul.f32 %v236, %v378
      %v397 = vmul.f32 %v237, %v368
      %v398 = vmul.f32 %v238, %v378
      %v399 = vmul.f32 %v239, %v368
      %v400 = vmul.f32 %v240, %v378
      %v401 = vmul.f32 %v241, %v368
      %v402 = vmul.f32 %v242, %v378
      %v403 = vmul.f32 %v243, %v368
      %v404 = vmul.f32 %v244, %v378
      %v405 = vmul.f32 %v245, %v368
      %v406 = vmul.f32 %v246, %v378
      %v407 = vmul.f32 %v247, %v368
      %v408 = vmul.f32 %v248, %v378
      %v409 = vmul.f32 %v249, %v368
      %v410 = vmul.f32 %v250, %v378
      %v411 = vsub.f32 %v379, %v251
      %v412 = vsub.f32 %v380, %v252
      %v413 = vsub.f32 %v381, %v253
      %v414 = vsub.f32 %v382, %v254
      %v415 = vsub.f32 %v383, %v255
      %v416 = vsub.f32 %v384, %v256
      %v417 = vsub.f32 %v385, %v257
      %v418 = vsub.f32 %v386, %v258
      %v419 = vsub.f32 %v387, %v259
      %v420 = vsub.f32 %v388, %v260
      %v421 = vsub.f32 %v389, %v261
      %v422 = vsub.f32 %v390, %v262
      %v423 = vsub.f32 %v391, %v263
      %v424 = vsub.f32 %v392, %v264
      %v425 = vsub.f32 %v393, %v265
      %v426 = vsub.f32 %v394, %v266
      %v427 = vsub.f32 %v395, %v267
      %v428 = vsub.f32 %v396, %v268
      %v429 = vsub.f32 %v397, %v269
      %v430 = vsub.f32 %v398, %v270
      %v431 = vsub.f32 %v399, %v271
      %v432 = vsub.f32 %v400, %v272
      %v433 = vsub.f32 %v401, %v273
      %v434 = vsub.f32 %v402, %v274
      %v435 = vsub.f32 %v403, %v275
      %v436 = vsub.f32 %v404, %v276
      %v437 = vsub.f32 %v405, %v277
      %v438 = vsub.f32 %v406, %v278
      %v439 = vsub.f32 %v407, %v279
      %v440 = vsub.f32 %v408, %v280
      %v441 = vsub.f32 %v409, %v281
      %v442 = vsub.f32 %v410, %v282
      %443 = vxpose.xlu0.b32.start [1/16] %v411, 128
      %444 = vxpose.xlu0.b32.cont [2/16] %v413, 128
      %445 = vxpose.xlu0.b32.cont [3/16] %v415, 128
      %446 = vxpose.xlu0.b32.cont [4/16] %v417, 128
      %447 = vxpose.xlu0.b32.cont [5/16] %v419, 128
      %448 = vxpose.xlu0.b32.cont [6/16] %v421, 128
      %449 = vxpose.xlu0.b32.cont [7/16] %v423, 128
      %450 = vxpose.xlu0.b32.cont [8/16] %v425, 128
      %451 = vxpose.xlu0.b32.cont [9/16] %v427, 128
      %452 = vxpose.xlu0.b32.cont [10/16] %v429, 128
      %453 = vxpose.xlu0.b32.cont [11/16] %v431, 128
      %454 = vxpose.xlu0.b32.cont [12/16] %v433, 128
      %455 = vxpose.xlu0.b32.cont [13/16] %v435, 128
      %456 = vxpose.xlu0.b32.cont [14/16] %v437, 128
      %457 = vxpose.xlu0.b32.cont [15/16] %v439, 128
      %458 = vxpose.xlu0.b32.end [16/16] %v441, 128
      %v459 = vpop.trf.xlu0
      %v460 = vpop.trf.xlu0
      %v461 = vpop.trf.xlu0
      %v462 = vpop.trf.xlu0
      %v463 = vpop.trf.xlu0
      %v464 = vpop.trf.xlu0
      %v465 = vpop.trf.xlu0
      %v466 = vpop.trf.xlu0
      %v467 = vpop.trf.xlu0
      %v468 = vpop.trf.xlu0
      %v469 = vpop.trf.xlu0
      %v470 = vpop.trf.xlu0
      %v471 = vpop.trf.xlu0
      %v472 = vpop.trf.xlu0
      %v473 = vpop.trf.xlu0
      %v474 = vpop.trf.xlu0
      %475 = vxpose.xlu0.b32.start [1/16] %v412, 128
      %476 = vxpose.xlu0.b32.cont [2/16] %v414, 128
      %477 = vxpose.xlu0.b32.cont [3/16] %v416, 128
      %478 = vxpose.xlu0.b32.cont [4/16] %v418, 128
      %479 = vxpose.xlu0.b32.cont [5/16] %v420, 128
      %480 = vxpose.xlu0.b32.cont [6/16] %v422, 128
      %481 = vxpose.xlu0.b32.cont [7/16] %v424, 128
      %482 = vxpose.xlu0.b32.cont [8/16] %v426, 128
      %483 = vxpose.xlu0.b32.cont [9/16] %v428, 128
      %484 = vxpose.xlu0.b32.cont [10/16] %v430, 128
      %485 = vxpose.xlu0.b32.cont [11/16] %v432, 128
      %486 = vxpose.xlu0.b32.cont [12/16] %v434, 128
      %487 = vxpose.xlu0.b32.cont [13/16] %v436, 128
      %488 = vxpose.xlu0.b32.cont [14/16] %v438, 128
      %489 = vxpose.xlu0.b32.cont [15/16] %v440, 128
      %490 = vxpose.xlu0.b32.end [16/16] %v442, 128
      %v491 = vpop.trf.xlu0
      %v492 = vpop.trf.xlu0
      %v493 = vpop.trf.xlu0
      %v494 = vpop.trf.xlu0
      %v495 = vpop.trf.xlu0
      %v496 = vpop.trf.xlu0
      %v497 = vpop.trf.xlu0
      %v498 = vpop.trf.xlu0
      %v499 = vpop.trf.xlu0
      %v500 = vpop.trf.xlu0
      %v501 = vpop.trf.xlu0
      %v502 = vpop.trf.xlu0
      %v503 = vpop.trf.xlu0
      %v504 = vpop.trf.xlu0
      %v505 = vpop.trf.xlu0
      %v506 = vpop.trf.xlu0
      %507 = vst [vmem:[%s217] sm:$0xff] %v459
      %508 = vst [vmem:[%s217 + $0x8] sm:$0xff] %v460
      %509 = vst [vmem:[%s217 + $0x10] sm:$0xff] %v461
      %510 = vst [vmem:[%s217 + $0x18] sm:$0xff] %v462
      %511 = vst [vmem:[%s217 + $0x20] sm:$0xff] %v463
      %512 = vst [vmem:[%s217 + $0x28] sm:$0xff] %v464
      %513 = vst [vmem:[%s217 + $0x30] sm:$0xff] %v465
      %514 = vst [vmem:[%s217 + $0x38] sm:$0xff] %v466
      %515 = vst [vmem:[%s217 + $0x40] sm:$0xff] %v467
      %516 = vst [vmem:[%s217 + $0x48] sm:$0xff] %v468
      %517 = vst [vmem:[%s217 + $0x50] sm:$0xff] %v469
      %518 = vst [vmem:[%s217 + $0x58] sm:$0xff] %v470
      %519 = vst [vmem:[%s217 + $0x60] sm:$0xff] %v471
      %520 = vst [vmem:[%s217 + $0x68] sm:$0xff] %v472
      %521 = vst [vmem:[%s217 + $0x70] sm:$0xff] %v473
      %522 = vst [vmem:[%s217 + $0x78] sm:$0xff] %v474
      %523 = vst [vmem:[%s217 + $0x80] sm:$0xff] %v491
      %524 = vst [vmem:[%s217 + $0x88] sm:$0xff] %v492
      %525 = vst [vmem:[%s217 + $0x90] sm:$0xff] %v493
      %526 = vst [vmem:[%s217 + $0x98] sm:$0xff] %v494
      %527 = vst [vmem:[%s217 + $0xa0] sm:$0xff] %v495
      %528 = vst [vmem:[%s217 + $0xa8] sm:$0xff] %v496
      %529 = vst [vmem:[%s217 + $0xb0] sm:$0xff] %v497
      %530 = vst [vmem:[%s217 + $0xb8] sm:$0xff] %v498
      %531 = vst [vmem:[%s217 + $0xc0] sm:$0xff] %v499
      %532 = vst [vmem:[%s217 + $0xc8] sm:$0xff] %v500
      %533 = vst [vmem:[%s217 + $0xd0] sm:$0xff] %v501
      %534 = vst [vmem:[%s217 + $0xd8] sm:$0xff] %v502
      %535 = vst [vmem:[%s217 + $0xe0] sm:$0xff] %v503
      %536 = vst [vmem:[%s217 + $0xe8] sm:$0xff] %v504
      %537 = vst [vmem:[%s217 + $0xf0] sm:$0xff] %v505
      %538 = vst [vmem:[%s217 + $0xf8] sm:$0xff] %v506
      %s539 = smul.u32 32, %s18
      %p540 = scmp.lt.s32.totalorder %s17, 1
      %s541 = scalar_select %p540, %s17, 1
      %p542 = scmp.lt.s32.totalorder %s539, 31
      %s543 = scalar_select %p542, %s539, 31
      %s544 = smul.addr %s541, 32
      %s545 = sadd.s32 %s543, %s544
      %s546 = smul.addr %s545, 8
      %s547 = scalar_lea.vmem %s2, %s546
      // Predicated region
      $region29: #{lmo_conv_forward.1} parent=27 // pred_check
        %p548 = pneg %p101
      $region30: #{lmo_conv_forward.1} parent=27 // pred_check_branch
        %550 = sbr.rel (%p548) target = $region32
      $region31: #{lmo_conv_forward.1} parent=27 // pred_region
        %s551 = smul.u32 32, %s18
      $region32: #{lmo_conv_forward.1} parent=27 // pred_fallthru
        _
    $region28: #{lmo_conv_forward.1} parent=5 // pred_fallthru
      _
    %p552 = scmp.le.s32.totalorder 2, %s8
    // Predicated region
    $region33: #{lmo_conv_forward.1} parent=5 // pred_check
      %p553 = pneg %p552
    $region34: #{lmo_conv_forward.1} parent=5 // pred_check_branch
      %555 = sbr.rel (%p553) target = $region36
    $region35: #{lmo_conv_forward.1} parent=5 // pred_region
      %s556 = ssub.s32 %s8, 2
      // Predicated region
      $region37: #{lmo_conv_forward.1} parent=35 // pred_check
        %p557 = pneg %p107
      $region38: #{lmo_conv_forward.1} parent=35 // pred_check_branch
        %559 = sbr.rel (%p557) target = $region40
      $region39: #{lmo_conv_forward.1} parent=35 // pred_region
        %s560 = smul.u32 32, %s20
        %p561 = scmp.lt.s32.totalorder %s19, 1
        %s562 = scalar_select %p561, %s19, 1
        %p563 = scmp.lt.s32.totalorder %s560, 31
        %s564 = scalar_select %p563, %s560, 31
        %s565 = smul.addr %s562, 32
        %s566 = sadd.s32 %s564, %s565
        %s567 = smul.addr %s566, 8
        %s568 = scalar_lea.vmem %s2, %s567
      $region40: #{lmo_conv_forward.1} parent=35 // pred_fallthru
        _
    $region36: #{lmo_conv_forward.1} parent=5 // pred_fallthru
      _
  $region6: #{lmo_conv_forward.1} parent=0 // loop_footer
    %s12 = sadd.s32 1, %s8
  $region7: #{lmo_conv_forward.1} parent=0 // loop_footer_branch
    %7 = sbr.rel target = $region3
  $region8: #{lmo_conv_forward.1} parent=0 // loop_exit
    _

</llo_original>
